<compile_context>
chip_gen: v6e
topology: v6e:2x2x1
jax: 0.10.0
libtpu: 0.0.40
codegen_flags: <defaults>
</compile_context>

<pallas_src>
import math
import jax
import jax.numpy as jnp
from jax.experimental import pallas as pl
from jax.experimental.pallas import tpu as pltpu


_GELU_C = math.sqrt(2.0 / math.pi)
_GELU_C3 = _GELU_C * 0.044715          # folded constant: one fewer vmul per element


def _ffn_kernel(x_ref, g_ref, beta_ref, w1_ref, b1_ref, w2_ref, b2_ref,
                o_ref, h_ref, acc_ref):
    f = pl.program_id(1)
    nf = pl.num_programs(1)

    @pl.when(f == 0)
    def _init():
        # LayerNorm(d_model, eps=1e-6) once per row tile; cache bf16 for all F chunks.
        x = x_ref[...].astype(jnp.float32)
        mu = jnp.mean(x, axis=-1, keepdims=True)
        var = jnp.mean(jnp.square(x - mu), axis=-1, keepdims=True)
        xn = (x - mu) * jax.lax.rsqrt(var + 1e-6)
        h = xn * g_ref[...].astype(jnp.float32) + beta_ref[...].astype(jnp.float32)
        h_ref[...] = h.astype(h_ref.dtype)
        acc_ref[...] = jnp.zeros_like(acc_ref)

    # --- w_1 chunk: (tm, D) @ (D, Fc) on the MXU, bf16 operands, f32 accumulation ---
    h1 = jnp.dot(h_ref[...], w1_ref[...], preferred_element_type=jnp.float32)
    h1 = h1 + b1_ref[...].astype(jnp.float32)

    # --- gelu (tanh approximation, exactly as in the PyTorch module), f32 math ---
    a = 0.5 * h1 * (1.0 + jnp.tanh(_GELU_C * h1 + _GELU_C3 * (h1 * h1 * h1)))
    # (dropout_1: identity in eval)

    # --- w_2 chunk: (tm, Fc) @ (Fc, D) accumulated into f32 scratch ---
    acc_ref[...] += jnp.dot(a.astype(w2_ref.dtype), w2_ref[...],
                            preferred_element_type=jnp.float32)

    @pl.when(f == nf - 1)
    def _finalize():
        # (dropout_2: identity in eval)  + bias + residual (re-read resident x tile)
        out = (acc_ref[...] + b2_ref[...].astype(jnp.float32)
               + x_ref[...].astype(jnp.float32))
        o_ref[...] = out.astype(o_ref.dtype)


def positionwise_feed_forward(x, gamma, beta, w1, b1, w2, b2, *,
                              tm=256, f_chunk=512):
    """x: [batch, seq, d_model]. w1: [d_model, d_ff], w2: [d_ff, d_model]."""
    B, S, D = x.shape
    F = w1.shape[1]
    N = B * S

    # Row tile: multiple of 8, no larger than the (8-rounded) row count.
    tm = max(8, min(int(tm), ((N + 7) // 8) * 8))
    tm = ((tm + 7) // 8) * 8
    n_pad = pl.cdiv(N, tm) * tm

    # F chunk: must be a multiple of 128 (lane/sublane constraints) that divides F;
    # otherwise run the full F in one step.
    if f_chunk % 128 == 0 and F % f_chunk == 0 and f_chunk < F:
        fc = int(f_chunk)
    else:
        fc = F
    nf = F // fc

    x2 = x.reshape(N, D)
    if n_pad != N:
        x2 = jnp.pad(x2, ((0, n_pad - N), (0, 0)))

    cdt = jnp.bfloat16  # MXU operand dtype (accumulation stays f32)

    gamma2 = gamma.reshape(1, D).astype(jnp.float32)
    beta2 = beta.reshape(1, D).astype(jnp.float32)
    b1_2 = b1.reshape(1, F).astype(jnp.float32)
    b2_2 = b2.reshape(1, D).astype(jnp.float32)
    w1_c = w1.astype(cdt)
    w2_c = w2.astype(cdt)

    xb = x2.dtype.itemsize
    vmem_est = (2 * tm * D * xb            # x tile (double-buffered)
                + 2 * tm * D * xb          # out tile (double-buffered)
                + 2 * D * fc * 2           # w1 chunk (bf16, double-buffered)
                + 2 * fc * D * 2           # w2 chunk (bf16, double-buffered)
                + 4 * (3 * D + fc) * 4     # gamma/beta/b1/b2 rows
                + tm * D * (2 + 4)         # h (bf16) + acc (f32) scratch
                + 2 * tm * fc * 4)         # h1 / gelu intermediates headroom
    vmem_limit = min(max(int(vmem_est * 1.5), 32 << 20), 64 << 20)

    out = pl.pallas_call(
        _ffn_kernel,
        out_shape=jax.ShapeDtypeStruct((n_pad, D), x.dtype),
        grid_spec=pltpu.PrefetchScalarGridSpec(
            num_scalar_prefetch=0,
            grid=(n_pad // tm, nf),
            in_specs=[
                pl.BlockSpec((tm, D), lambda i, f: (i, 0)),   # x rows (resident over F)
                pl.BlockSpec((1, D), lambda i, f: (0, 0)),    # ln gamma
                pl.BlockSpec((1, D), lambda i, f: (0, 0)),    # ln beta
                pl.BlockSpec((D, fc), lambda i, f: (0, f)),   # w1 F-chunk
                pl.BlockSpec((1, fc), lambda i, f: (0, f)),   # b1 F-chunk
                pl.BlockSpec((fc, D), lambda i, f: (f, 0)),   # w2 F-chunk
                pl.BlockSpec((1, D), lambda i, f: (0, 0)),    # b2
            ],
            out_specs=pl.BlockSpec((tm, D), lambda i, f: (i, 0)),
            scratch_shapes=[
                pltpu.VMEM((tm, D), cdt),          # cached layer-normed activations
                pltpu.VMEM((tm, D), jnp.float32),  # f32 accumulator across F chunks
            ],
        ),
        compiler_params=pltpu.CompilerParams(
            dimension_semantics=("parallel", "arbitrary"),
            vmem_limit_bytes=vmem_limit,
        ),
    )(x2, gamma2, beta2, w1_c, b1_2, w2_c, b2_2)

    return out[:N].reshape(B, S, D)


def _reference(x, gamma, beta, w1, b1, w2, b2):
    """Pure-JAX reference mirroring the kernel's bf16 MXU operands / f32 accum."""
    xf = x.astype(jnp.float32)
    mu = jnp.mean(xf, axis=-1, keepdims=True)
    var = jnp.mean(jnp.square(xf - mu), axis=-1, keepdims=True)
    h = (xf - mu) / jnp.sqrt(var + 1e-6) * gamma + beta
    h1 = jnp.dot(h.astype(jnp.bfloat16), w1.astype(jnp.bfloat16),
                 preferred_element_type=jnp.float32) + b1
    c = math.sqrt(2.0 / math.pi)
    a = 0.5 * h1 * (1.0 + jnp.tanh(c * (h1 + 0.044715 * h1 ** 3)))
    h2 = jnp.dot(a.astype(jnp.bfloat16), w2.astype(jnp.bfloat16),
                 preferred_element_type=jnp.float32) + b2
    return h2 + xf


def _make_params(key, d_model, d_ff):
    k_w1, k_b1, k_w2, k_b2 = jax.random.split(key, 4)
    lim1 = 1.0 / math.sqrt(d_model)
    lim2 = 1.0 / math.sqrt(d_ff)
    w1 = jax.random.uniform(k_w1, (d_model, d_ff), jnp.float32, -lim1, lim1)
    b1 = jax.random.uniform(k_b1, (d_ff,), jnp.float32, -lim1, lim1)
    w2 = jax.random.uniform(k_w2, (d_ff, d_model), jnp.float32, -lim2, lim2)
    b2 = jax.random.uniform(k_b2, (d_model,), jnp.float32, -lim2, lim2)
    gamma = jnp.ones((d_model,), jnp.float32)
    beta = jnp.zeros((d_model,), jnp.float32)
    return gamma, beta, w1, b1, w2, b2


if __name__ == "__main__":
    key = jax.random.PRNGKey(0)

    # Case 1: tiny shapes (single F step, single row tile).
    k1, k2, k3, k4 = jax.random.split(key, 4)
    batch, seq, d_model, d_ff = 2, 8, 32, 64
    x = jax.random.normal(k1, (batch, seq, d_model), dtype=jnp.float32)
    params = _make_params(k2, d_model, d_ff)
    out = jax.block_until_ready(positionwise_feed_forward(x, *params))
    ref = _reference(x, *params)
    assert out.shape == x.shape
    assert jnp.max(jnp.abs(out - ref)) < 1e-2, "mismatch vs reference (case 1)"

    # Case 2: exercises F-chunk accumulation and row padding (N=40, 2 F chunks).
    batch, seq, d_model, d_ff = 2, 20, 128, 256
    x = jax.random.normal(k3, (batch, seq, d_model), dtype=jnp.float32)
    params = _make_params(k4, d_model, d_ff)
    out = jax.block_until_ready(
        positionwise_feed_forward(x, *params, tm=256, f_chunk=128))
    ref = _reference(x, *params)
    assert out.shape == x.shape
    assert jnp.max(jnp.abs(out - ref)) < 1e-2, "mismatch vs reference (case 2)"

    print("KERNEL_OK")
</pallas_src>

<mosaic_0001>
module attributes {stable_mosaic.version = 11 : i64} {
  func.func @_ffn_kernel(%arg0: i32, %arg1: i32, %arg2: memref<16x32xf32, #tpu.memory_space<vmem>>, %arg3: memref<1x32xf32, #tpu.memory_space<vmem>>, %arg4: memref<1x32xf32, #tpu.memory_space<vmem>>, %arg5: memref<32x64xbf16, #tpu.memory_space<vmem>>, %arg6: memref<1x64xf32, #tpu.memory_space<vmem>>, %arg7: memref<64x32xbf16, #tpu.memory_space<vmem>>, %arg8: memref<1x32xf32, #tpu.memory_space<vmem>>, %arg9: memref<16x32xf32, #tpu.memory_space<vmem>>, %arg10: memref<16x32xbf16, #tpu.memory_space<vmem>>, %arg11: memref<16x32xf32, #tpu.memory_space<vmem>>) attributes {dimension_semantics = [#tpu.dimension_semantics<parallel>, #tpu.dimension_semantics<arbitrary>], iteration_bounds = array<i64: 1, 1>, scalar_prefetch = 0 : i64, scratch_operands = 2 : i64, tpu.core_type = #tpu.core_type<tc>, window_params = [{transform_indices = @transform_0, window_bounds = array<i64: 16, 32>}, {pipeline_mode = #tpu.pipeline_mode<synchronous>, transform_indices = @transform_1, window_bounds = array<i64: 1, 32>}, {pipeline_mode = #tpu.pipeline_mode<synchronous>, transform_indices = @transform_2, window_bounds = array<i64: 1, 32>}, {transform_indices = @transform_3, window_bounds = array<i64: 32, 64>}, {transform_indices = @transform_4, window_bounds = array<i64: 1, 64>}, {transform_indices = @transform_5, window_bounds = array<i64: 64, 32>}, {pipeline_mode = #tpu.pipeline_mode<synchronous>, transform_indices = @transform_6, window_bounds = array<i64: 1, 32>}, {transform_indices = @transform_7, window_bounds = array<i64: 16, 32>}]} {
    %c0_i32 = arith.constant 0 : i32
    %0 = arith.cmpi eq, %arg1, %c0_i32 : i32
    %1 = arith.extui %0 : i1 to i32
    %c0_i32_0 = arith.constant 0 : i32
    %2 = arith.cmpi ne, %1, %c0_i32_0 : i32
    scf.if %2 {
      %c0_19 = arith.constant 0 : index
      %c0_20 = arith.constant 0 : index
      %31 = vector.load %arg2[%c0_19, %c0_20] : memref<16x32xf32, #tpu.memory_space<vmem>>, vector<16x32xf32>
      %cst_21 = arith.constant dense<0.000000e+00> : vector<16xf32>
      %32 = vector.multi_reduction <add>, %31, %cst_21 [1] : vector<16x32xf32> to vector<16xf32>
      %33 = vector.shape_cast %32 : vector<16xf32> to vector<16x1xf32>
      %cst_22 = arith.constant 3.200000e+01 : f32
      %34 = vector.broadcast %cst_22 : f32 to vector<16x1xf32>
      %35 = arith.divf %33, %34 : vector<16x1xf32>
      %36 = vector.broadcast %35 : vector<16x1xf32> to vector<16x32xf32>
      %37 = arith.subf %31, %36 : vector<16x32xf32>
      %38 = arith.mulf %37, %37 : vector<16x32xf32>
      %cst_23 = arith.constant dense<0.000000e+00> : vector<16xf32>
      %39 = vector.multi_reduction <add>, %38, %cst_23 [1] : vector<16x32xf32> to vector<16xf32>
      %40 = vector.shape_cast %39 : vector<16xf32> to vector<16x1xf32>
      %cst_24 = arith.constant 3.200000e+01 : f32
      %41 = vector.broadcast %cst_24 : f32 to vector<16x1xf32>
      %42 = arith.divf %40, %41 : vector<16x1xf32>
      %43 = vector.broadcast %35 : vector<16x1xf32> to vector<16x32xf32>
      %44 = arith.subf %31, %43 : vector<16x32xf32>
      %cst_25 = arith.constant 9.99999997E-7 : f32
      %45 = vector.broadcast %cst_25 : f32 to vector<16x1xf32>
      %46 = arith.addf %42, %45 : vector<16x1xf32>
      %47 = math.rsqrt %46 : vector<16x1xf32>
      %48 = vector.broadcast %47 : vector<16x1xf32> to vector<16x32xf32>
      %49 = arith.mulf %44, %48 : vector<16x32xf32>
      %c0_26 = arith.constant 0 : index
      %c0_27 = arith.constant 0 : index
      %50 = vector.load %arg3[%c0_26, %c0_27] : memref<1x32xf32, #tpu.memory_space<vmem>>, vector<1x32xf32>
      %51 = vector.broadcast %50 : vector<1x32xf32> to vector<16x32xf32>
      %52 = arith.mulf %49, %51 : vector<16x32xf32>
      %c0_28 = arith.constant 0 : index
      %c0_29 = arith.constant 0 : index
      %53 = vector.load %arg4[%c0_28, %c0_29] : memref<1x32xf32, #tpu.memory_space<vmem>>, vector<1x32xf32>
      %54 = vector.broadcast %53 : vector<1x32xf32> to vector<16x32xf32>
      %55 = arith.addf %52, %54 : vector<16x32xf32>
      %56 = arith.truncf %55 : vector<16x32xf32> to vector<16x32xbf16>
      %c0_30 = arith.constant 0 : index
      %c0_31 = arith.constant 0 : index
      %57 = vector.load %arg10[%c0_30, %c0_31] : memref<16x32xbf16, #tpu.memory_space<vmem>>, vector<16x32xbf16>
      tpu.vector_store %arg10[%c0_30, %c0_31], %56 {strides = array<i32>} : memref<16x32xbf16, #tpu.memory_space<vmem>>, vector<16x32xbf16>,
      %cst_32 = arith.constant 0.000000e+00 : f32
      %58 = vector.broadcast %cst_32 : f32 to vector<16x32xf32>
      %c0_33 = arith.constant 0 : index
      %c0_34 = arith.constant 0 : index
      %59 = vector.load %arg11[%c0_33, %c0_34] : memref<16x32xf32, #tpu.memory_space<vmem>>, vector<16x32xf32>
      tpu.vector_store %arg11[%c0_33, %c0_34], %58 {strides = array<i32>} : memref<16x32xf32, #tpu.memory_space<vmem>>, vector<16x32xf32>,
    } else {
    }
    %c0 = arith.constant 0 : index
    %c0_1 = arith.constant 0 : index
    %3 = vector.load %arg10[%c0, %c0_1] : memref<16x32xbf16, #tpu.memory_space<vmem>>, vector<16x32xbf16>
    %c0_2 = arith.constant 0 : index
    %c0_3 = arith.constant 0 : index
    %4 = vector.load %arg5[%c0_2, %c0_3] : memref<32x64xbf16, #tpu.memory_space<vmem>>, vector<32x64xbf16>
    %cst = arith.constant dense<0.000000e+00> : vector<16x64xf32>
    %5 = tpu.matmul %3, %4, %cst {dimension_numbers = #tpu.dot_dimension_numbers<[1], [0], [0], [1], [0, 0, 1, 1], [], []>} : vector<16x32xbf16>, vector<32x64xbf16>, vector<16x64xf32> -> vector<16x64xf32>
    %c0_4 = arith.constant 0 : index
    %c0_5 = arith.constant 0 : index
    %6 = vector.load %arg6[%c0_4, %c0_5] : memref<1x64xf32, #tpu.memory_space<vmem>>, vector<1x64xf32>
    %7 = vector.broadcast %6 : vector<1x64xf32> to vector<16x64xf32>
    %8 = arith.addf %5, %7 : vector<16x64xf32>
    %cst_6 = arith.constant 5.000000e-01 : f32
    %9 = vector.broadcast %cst_6 : f32 to vector<16x64xf32>
    %10 = arith.mulf %9, %8 : vector<16x64xf32>
    %cst_7 = arith.constant 0.797884583 : f32
    %11 = vector.broadcast %cst_7 : f32 to vector<16x64xf32>
    %12 = arith.mulf %11, %8 : vector<16x64xf32>
    %13 = arith.mulf %8, %8 : vector<16x64xf32>
    %14 = arith.mulf %13, %8 : vector<16x64xf32>
    %cst_8 = arith.constant 0.0356774069 : f32
    %15 = vector.broadcast %cst_8 : f32 to vector<16x64xf32>
    %16 = arith.mulf %15, %14 : vector<16x64xf32>
    %17 = arith.addf %12, %16 : vector<16x64xf32>
    %18 = math.tanh %17 : vector<16x64xf32>
    %cst_9 = arith.constant 1.000000e+00 : f32
    %19 = vector.broadcast %cst_9 : f32 to vector<16x64xf32>
    %20 = arith.addf %19, %18 : vector<16x64xf32>
    %21 = arith.mulf %10, %20 : vector<16x64xf32>
    %c0_10 = arith.constant 0 : index
    %c0_11 = arith.constant 0 : index
    %22 = vector.load %arg11[%c0_10, %c0_11] : memref<16x32xf32, #tpu.memory_space<vmem>>, vector<16x32xf32>
    %23 = arith.truncf %21 : vector<16x64xf32> to vector<16x64xbf16>
    %c0_12 = arith.constant 0 : index
    %c0_13 = arith.constant 0 : index
    %24 = vector.load %arg7[%c0_12, %c0_13] : memref<64x32xbf16, #tpu.memory_space<vmem>>, vector<64x32xbf16>
    %cst_14 = arith.constant dense<0.000000e+00> : vector<16x32xf32>
    %25 = tpu.matmul %23, %24, %cst_14 {dimension_numbers = #tpu.dot_dimension_numbers<[1], [0], [0], [1], [0, 0, 1, 1], [], []>} : vector<16x64xbf16>, vector<64x32xbf16>, vector<16x32xf32> -> vector<16x32xf32>
    %26 = arith.addf %22, %25 : vector<16x32xf32>
    %c0_15 = arith.constant 0 : index
    %c0_16 = arith.constant 0 : index
    %27 = vector.load %arg11[%c0_15, %c0_16] : memref<16x32xf32, #tpu.memory_space<vmem>>, vector<16x32xf32>
    tpu.vector_store %arg11[%c0_15, %c0_16], %26 {strides = array<i32>} : memref<16x32xf32, #tpu.memory_space<vmem>>, vector<16x32xf32>,
    %c0_i32_17 = arith.constant 0 : i32
    %28 = arith.cmpi eq, %arg1, %c0_i32_17 : i32
    %29 = arith.extui %28 : i1 to i32
    %c0_i32_18 = arith.constant 0 : i32
    %30 = arith.cmpi ne, %29, %c0_i32_18 : i32
    scf.if %30 {
      %c0_19 = arith.constant 0 : index
      %c0_20 = arith.constant 0 : index
      %31 = vector.load %arg11[%c0_19, %c0_20] : memref<16x32xf32, #tpu.memory_space<vmem>>, vector<16x32xf32>
      %c0_21 = arith.constant 0 : index
      %c0_22 = arith.constant 0 : index
      %32 = vector.load %arg8[%c0_21, %c0_22] : memref<1x32xf32, #tpu.memory_space<vmem>>, vector<1x32xf32>
      %33 = vector.broadcast %32 : vector<1x32xf32> to vector<16x32xf32>
      %34 = arith.addf %31, %33 : vector<16x32xf32>
      %c0_23 = arith.constant 0 : index
      %c0_24 = arith.constant 0 : index
      %35 = vector.load %arg2[%c0_23, %c0_24] : memref<16x32xf32, #tpu.memory_space<vmem>>, vector<16x32xf32>
      %36 = arith.addf %34, %35 : vector<16x32xf32>
      %c0_25 = arith.constant 0 : index
      %c0_26 = arith.constant 0 : index
      %37 = vector.load %arg9[%c0_25, %c0_26] : memref<16x32xf32, #tpu.memory_space<vmem>>, vector<16x32xf32>
      tpu.vector_store %arg9[%c0_25, %c0_26], %36 {strides = array<i32>} : memref<16x32xf32, #tpu.memory_space<vmem>>, vector<16x32xf32>,
    } else {
    }
    return
  }
  func.func @transform_0(%arg0: i32, %arg1: i32) -> (i32, i32) {
    %c0_i32 = arith.constant 0 : i32
    %c0_i32_0 = arith.constant 0 : i32
    return %arg0, %c0_i32 : i32, i32
  }
  func.func @transform_1(%arg0: i32, %arg1: i32) -> (i32, i32) {
    %c0_i32 = arith.constant 0 : i32
    %c0_i32_0 = arith.constant 0 : i32
    %c0_i32_1 = arith.constant 0 : i32
    return %c0_i32, %c0_i32_0 : i32, i32
  }
  func.func @transform_2(%arg0: i32, %arg1: i32) -> (i32, i32) {
    %c0_i32 = arith.constant 0 : i32
    %c0_i32_0 = arith.constant 0 : i32
    %c0_i32_1 = arith.constant 0 : i32
    return %c0_i32, %c0_i32_0 : i32, i32
  }
  func.func @transform_3(%arg0: i32, %arg1: i32) -> (i32, i32) {
    %c0_i32 = arith.constant 0 : i32
    %c0_i32_0 = arith.constant 0 : i32
    return %c0_i32, %arg1 : i32, i32
  }
  func.func @transform_4(%arg0: i32, %arg1: i32) -> (i32, i32) {
    %c0_i32 = arith.constant 0 : i32
    %c0_i32_0 = arith.constant 0 : i32
    return %c0_i32, %arg1 : i32, i32
  }
  func.func @transform_5(%arg0: i32, %arg1: i32) -> (i32, i32) {
    %c0_i32 = arith.constant 0 : i32
    %c0_i32_0 = arith.constant 0 : i32
    return %arg1, %c0_i32 : i32, i32
  }
  func.func @transform_6(%arg0: i32, %arg1: i32) -> (i32, i32) {
    %c0_i32 = arith.constant 0 : i32
    %c0_i32_0 = arith.constant 0 : i32
    %c0_i32_1 = arith.constant 0 : i32
    return %c0_i32, %c0_i32_0 : i32, i32
  }
  func.func @transform_7(%arg0: i32, %arg1: i32) -> (i32, i32) {
    %c0_i32 = arith.constant 0 : i32
    %c0_i32_0 = arith.constant 0 : i32
    return %arg0, %c0_i32 : i32, i32
  }
}

</mosaic_0001>

<llo_original>
// kernel: tpu_custom_call.1
$region0: #{tpu_custom_call.1}
  #allocation0 [shape = 'u32[]', space=smem, size = 0x4, offset = 0x4, fixed_abs, tag = 'smem constant byte address 0x4 - core index']
  #allocation1 [shape = 'u32[144,128]{1,0:T(1,128)}', space=vmem, size = 0x12000, scoped, tag = 'internal scratch']
  #allocation2 [shape = 'bf16[16,32]{1,0:T(8,128)(2,1)}', space=vmem, size = 0x1000, scoped, tag = 'scratch operand']
  #allocation3 [shape = 'f32[16,32]{1,0:T(8,128)}', space=vmem, size = 0x2000, scoped, tag = 'scratch operand']
  %s0 = inlined_call_operand.vmem [shape: f32[16,32], index: 0, kind: input, shape index: {}]
  %s1 = inlined_call_operand.vmem [shape: f32[1,32], index: 1, kind: input, shape index: {}]
  %s2 = inlined_call_operand.vmem [shape: f32[1,32], index: 2, kind: input, shape index: {}]
  %s3 = inlined_call_operand.vmem [shape: bf16[32,64], index: 3, kind: input, shape index: {}]
  %s4 = inlined_call_operand.vmem [shape: f32[1,64], index: 4, kind: input, shape index: {}]
  %s5 = inlined_call_operand.vmem [shape: bf16[64,32], index: 5, kind: input, shape index: {}]
  %s6 = inlined_call_operand.vmem [shape: f32[1,32], index: 6, kind: input, shape index: {}]
  %s7 = inlined_call_operand.hbm [shape: f32[16,32], index: 7, kind: output, shape index: {}]
  %s8 = sld [smem:[#allocation0]]
  $region46: #{tpu_custom_call.1} parent=0
    _
  %s10 = ssub.s32 1, %s8
  %s11 = scalar_select 0, %s10, %s8
  $region1: #{tpu_custom_call.1} parent=0
    #allocation4 [shape = 'u8[8192]{0}', space=vmem, size = 0x2000, scoped, tag = 'output window, operand 0, single buffered']
    #allocation5 [shape = 's32[1]{0}', space=sflag, size = 0x4, scoped, tag = 'scoped memory for tpu_custom_call.1']
    %12 = vsyncpa [#allocation5], 0
    // Predicated region
    $region2: #{tpu_custom_call.1} parent=1 // pred_check
      _
    $region3: #{tpu_custom_call.1} parent=1 // pred_check_branch
      %14 = sbr.rel (0) target = $region5
    $region4: #{tpu_custom_call.1} parent=1 // pred_region
      _
    $region5: #{tpu_custom_call.1} parent=1 // pred_fallthru
      _
    // Predicated region
    $region6: #{tpu_custom_call.1} parent=1 // pred_check
      _
    $region7: #{tpu_custom_call.1} parent=1 // pred_check_branch
      %16 = sbr.rel (0) target = $region9
    $region8: #{tpu_custom_call.1} parent=1 // pred_region
      _
    $region9: #{tpu_custom_call.1} parent=1 // pred_fallthru
      _
    // Predicated region
    $region10: #{tpu_custom_call.1} parent=1 // pred_check
      _
    $region11: #{tpu_custom_call.1} parent=1 // pred_check_branch
      %18 = sbr.rel (0) target = $region13
    $region12: #{tpu_custom_call.1} parent=1 // pred_region
      _
    $region13: #{tpu_custom_call.1} parent=1 // pred_fallthru
      _
    // Predicated region
    $region14: #{tpu_custom_call.1} parent=1 // pred_check
      _
    $region15: #{tpu_custom_call.1} parent=1 // pred_check_branch
      %20 = sbr.rel (0) target = $region17
    $region16: #{tpu_custom_call.1} parent=1 // pred_region
      _
    $region17: #{tpu_custom_call.1} parent=1 // pred_fallthru
      _
    // Predicated region
    $region18: #{tpu_custom_call.1} parent=1 // pred_check
      _
    $region19: #{tpu_custom_call.1} parent=1 // pred_check_branch
      %22 = sbr.rel (0) target = $region21
    $region20: #{tpu_custom_call.1} parent=1 // pred_region
      _
    $region21: #{tpu_custom_call.1} parent=1 // pred_fallthru
      _
    // Predicated region
    $region22: #{tpu_custom_call.1} parent=1 // pred_check
      _
    $region23: #{tpu_custom_call.1} parent=1 // pred_check_branch
      %24 = sbr.rel (0) target = $region25
    $region24: #{tpu_custom_call.1} parent=1 // pred_region
      _
    $region25: #{tpu_custom_call.1} parent=1 // pred_fallthru
      _
    // Predicated region
    $region26: #{tpu_custom_call.1} parent=1 // pred_check
      _
    $region27: #{tpu_custom_call.1} parent=1 // pred_check_branch
      %26 = sbr.rel (0) target = $region29
    $region28: #{tpu_custom_call.1} parent=1 // pred_region
      _
    $region29: #{tpu_custom_call.1} parent=1 // pred_fallthru
      _
    %p28 = scmp.eq.s32.totalorder 0, 0
    // Predicated region
    $region30: #{tpu_custom_call.1} parent=1 // pred_check
      %p29 = pneg %p28
    $region31: #{tpu_custom_call.1} parent=1 // pred_check_branch
      %31 = sbr.rel (%p29) target = $region33
    $region32: #{tpu_custom_call.1} parent=1 // pred_region
      %v32 = vld [vmem:[%s0] sm:$0xff]
      %v33 = vld [vmem:[%s0 + $0x8] sm:$0xff]
      %vm34 = vcmask 261120
      %v35 = vsel %vm34, %v32, 0.0
      %36 = vadd.xlane.f32.xlu0 %v35
      %v37 = vpop.xlane.xlu0 %36
      %v38 = vsel %vm34, %v33, 0.0
      %39 = vadd.xlane.f32.xlu0 %v38
      %v40 = vpop.xlane.xlu0 %39
      %v41 = vrcp.pop 32.0
      %v42 = vmul.f32 %v37, %v41
      %v43 = vmul.f32 %v40, %v41
      %v44 = vsub.f32 %v32, %v42
      %v45 = vsub.f32 %v33, %v43
      %v46 = vmul.f32 %v44, %v44
      %v47 = vmul.f32 %v45, %v45
      %v48 = vsel %vm34, %v46, 0.0
      %49 = vadd.xlane.f32.xlu0 %v48
      %v50 = vpop.xlane.xlu0 %49
      %v51 = vsel %vm34, %v47, 0.0
      %52 = vadd.xlane.f32.xlu0 %v51
      %v53 = vpop.xlane.xlu0 %52
      %v54 = vmul.f32 %v50, %v41
      %v55 = vmul.f32 %v53, %v41
      %v56 = vadd.f32 %v54, 1e-06
      %v57 = vadd.f32 %v55, 1e-06
      %v58 = vrsqrt.pop %v56
      %v59 = vrsqrt.pop %v57
      %v60 = vmul.f32 %v44, %v58
      %v61 = vmul.f32 %v45, %v59
      %v62 = vld [vmem:[%s1] sm:$0x1]
      %v64 = vlaneseq
      %v65 = vshrl.u32 %v64, 7
      %v66 = vsub.s32 0, %v65
      %v67 = vrot.slane %v62, %v66
      %v69 = vmul.f32 %v60, %v67
      %v70 = vmul.f32 %v61, %v67
      %v71 = vld [vmem:[%s2] sm:$0x1]
      %v73 = vlaneseq
      %v74 = vshrl.u32 %v73, 7
      %v75 = vsub.s32 0, %v74
      %v76 = vrot.slane %v71, %v75
      %v78 = vadd.f32 %v69, %v76
      %v79 = vadd.f32 %v70, %v76
      %v80 = vpack.c.bf16 %v79, %v78
      %v82 = vunpack.c.l.b16 %v80
      %v83 = vunpack.c.h.b16 %v80
      %v84 = vpack.c.b16 %v82, %v82
      %v85 = vpack.c.b16 %v83, %v83
      %vm88 = vcmask 257024
      %89 = vst.msk [vmem:[#allocation2] sm:$0xf] %vm88, %v84
      %90 = vst.msk [vmem:[#allocation2 + $0x4] sm:$0xf] %vm88, %v85
      %91 = vst.msk [vmem:[#allocation3] sm:$0xff] %vm34, 0.0
      %92 = vst.msk [vmem:[#allocation3 + $0x8] sm:$0xff] %vm34, 0.0
    $region33: #{tpu_custom_call.1} parent=1 // pred_fallthru
      _
    %v93 = vld [vmem:[#allocation2] sm:$0xf]
    %v94 = vld [vmem:[#allocation2 + $0x4] sm:$0xf]
    %v95 = vld [vmem:[%s3] sm:$0xf]
    %v96 = vld [vmem:[%s3 + $0x4] sm:$0xf]
    %v97 = vld [vmem:[%s3 + $0x8] sm:$0xf]
    %v98 = vld [vmem:[%s3 + $0xc] sm:$0xf]
    %v99 = vld [vmem:[%s4] sm:$0x1]
    %v101 = vlaneseq
    %v102 = vshrl.u32 %v101, 7
    %v103 = vsub.s32 0, %v102
    %v104 = vrot.slane %v99, %v103
    %v108 = vunpack.c.l.b16 %v93
    %v109 = vunpack.c.l.b16 %v94
    %v110 = vpack.c.b16 %v109, %v108
    %v115 = vunpack.c.l.b16 %v95
    %v116 = vunpack.c.l.b16 %v96
    %v117 = vunpack.c.l.b16 %v97
    %v118 = vunpack.c.l.b16 %v98
    %v119 = vpack.c.b16 %v116, %v115
    %v120 = vpack.c.b16 %v118, %v117
    %vm123 = vcmask 261120
    %v125 = vsel %vm123, %v110, 0
    %127 = vmatprep.subr.bf16.mxu0 0
    %128 = vmatpush1.bf16.msra.mxu0 0
    %129 = vmatprep.subr.bf16.mxu0 0
    %130 = vmatpush1.bf16.msra.mxu0 0
    %131 = vmatprep.subr.bf16.mxu0 0
    %132 = vmatpush1.bf16.msra.mxu0 0
    %133 = vmatprep.subr.bf16.mxu0 0
    %134 = vmatpush1.bf16.msra.mxu0 0
    %135 = vmatprep.subr.bf16.mxu0 0
    %136 = vmatpush1.bf16.msra.mxu0 0
    %137 = vmatprep.subr.bf16.mxu0 0
    %138 = vmatpush1.bf16.msra.mxu0 0
    %139 = vmatprep.subr.bf16.mxu0 0
    %140 = vmatpush1.bf16.msra.mxu0 %v120
    %141 = vmatprep.subr.bf16.mxu0 0
    %142 = vmatpush1.bf16.msra.mxu0 %v119
    %143 = vmatprep.subr.bf16.mxu0 0
    %144 = vmatpush2.bf16.msra.mxu0 0
    %145 = vmatprep.subr.bf16.mxu0 0
    %146 = vmatpush2.bf16.msra.mxu0 0
    %147 = vmatprep.subr.bf16.mxu0 0
    %148 = vmatpush2.bf16.msra.mxu0 0
    %149 = vmatprep.subr.bf16.mxu0 0
    %150 = vmatpush2.bf16.msra.mxu0 0
    %151 = vmatprep.subr.bf16.mxu0 0
    %152 = vmatpush2.bf16.msra.mxu0 0
    %153 = vmatprep.subr.bf16.mxu0 0
    %154 = vmatpush2.bf16.msra.mxu0 0
    %155 = vmatprep.subr.bf16.mxu0 0
    %156 = vmatpush2.bf16.msra.mxu0 0
    %157 = vmatprep.subr.bf16.mxu0 0
    %158 = vmatpush2.bf16.msra.mxu0 0
    %159 = vmatprep.mubr.bf16.mxu0 0
    %160 = vmatmul.mubr.bf16.gmra.mxu0 %v125
    %v161 = vpop.f32.mrf.mxu0
    %v162 = vadd.f32 %v104, %v161
    %v163 = vpop.f32.mrf.mxu0
    %v164 = vpop.f32.mrf.mxu0
    %v165 = vadd.f32 %v104, %v164
    %v166 = vpop.f32.mrf.mxu0
    %167 = vdwg.mxu0
    %v168 = vmul.f32 %v162, 0.5
    %v169 = vmul.f32 %v165, 0.5
    %v170 = vmul.f32 %v162, 0.7978846
    %v171 = vmul.f32 %v165, 0.7978846
    %v172 = vmul.f32 %v162, %v162
    %v173 = vmul.f32 %v165, %v165
    %v174 = vmul.f32 %v172, %v162
    %v175 = vmul.f32 %v173, %v165
    %v176 = vmul.f32 %v174, 0.035677407
    %v177 = vmul.f32 %v175, 0.035677407
    %v178 = vadd.f32 %v170, %v176
    %v179 = vadd.f32 %v171, %v177
    %v180 = vtanh.pop %v178
    %v181 = vtanh.pop %v179
    %v182 = vadd.f32 %v180, 1.0
    %v183 = vadd.f32 %v181, 1.0
    %v184 = vmul.f32 %v168, %v182
    %v185 = vmul.f32 %v169, %v183
    %v186 = vld [vmem:[#allocation3] sm:$0xff]
    %v187 = vld [vmem:[#allocation3 + $0x8] sm:$0xff]
    %v188 = vpack.c.bf16 %v185, %v184
    %v189 = vld [vmem:[%s5] sm:$0xf]
    %v190 = vld [vmem:[%s5 + $0x4] sm:$0xf]
    %v191 = vld [vmem:[%s5 + $0x8] sm:$0xf]
    %v192 = vld [vmem:[%s5 + $0xc] sm:$0xf]
    %v193 = vld [vmem:[%s5 + $0x10] sm:$0xf]
    %v194 = vld [vmem:[%s5 + $0x14] sm:$0xf]
    %v195 = vld [vmem:[%s5 + $0x18] sm:$0xf]
    %v196 = vld [vmem:[%s5 + $0x1c] sm:$0xf]
    %v205 = vunpack.c.l.b16 %v189
    %v206 = vunpack.c.l.b16 %v190
    %v207 = vunpack.c.l.b16 %v191
    %v208 = vunpack.c.l.b16 %v192
    %v209 = vunpack.c.l.b16 %v193
    %v210 = vunpack.c.l.b16 %v194
    %v211 = vunpack.c.l.b16 %v195
    %v212 = vunpack.c.l.b16 %v196
    %v213 = vpack.c.b16 %v206, %v205
    %v214 = vpack.c.b16 %v208, %v207
    %v215 = vpack.c.b16 %v210, %v209
    %v216 = vpack.c.b16 %v212, %v211
    %vm221 = vcmask 523264
    %v223 = vsel %vm221, %v188, 0
    %225 = vmatprep.subr.bf16.mxu0 0
    %226 = vmatpush1.bf16.msra.mxu0 0
    %227 = vmatprep.subr.bf16.mxu0 0
    %228 = vmatpush1.bf16.msra.mxu0 0
    %229 = vmatprep.subr.bf16.mxu0 0
    %230 = vmatpush1.bf16.msra.mxu0 0
    %231 = vmatprep.subr.bf16.mxu0 0
    %232 = vmatpush1.bf16.msra.mxu0 0
    %233 = vmatprep.subr.bf16.mxu0 0
    %234 = vmatpush1.bf16.msra.mxu0 %v216
    %235 = vmatprep.subr.bf16.mxu0 0
    %236 = vmatpush1.bf16.msra.mxu0 %v215
    %237 = vmatprep.subr.bf16.mxu0 0
    %238 = vmatpush1.bf16.msra.mxu0 %v214
    %239 = vmatprep.subr.bf16.mxu0 0
    %240 = vmatpush1.bf16.msra.mxu0 %v213
    %241 = vmatprep.subr.bf16.mxu0 0
    %242 = vmatpush2.bf16.msra.mxu0 0
    %243 = vmatprep.subr.bf16.mxu0 0
    %244 = vmatpush2.bf16.msra.mxu0 0
    %245 = vmatprep.subr.bf16.mxu0 0
    %246 = vmatpush2.bf16.msra.mxu0 0
    %247 = vmatprep.subr.bf16.mxu0 0
    %248 = vmatpush2.bf16.msra.mxu0 0
    %249 = vmatprep.subr.bf16.mxu0 0
    %250 = vmatpush2.bf16.msra.mxu0 0
    %251 = vmatprep.subr.bf16.mxu0 0
    %252 = vmatpush2.bf16.msra.mxu0 0
    %253 = vmatprep.subr.bf16.mxu0 0
    %254 = vmatpush2.bf16.msra.mxu0 0
    %255 = vmatprep.subr.bf16.mxu0 0
    %256 = vmatpush2.bf16.msra.mxu0 0
    %257 = vmatprep.mubr.bf16.mxu0 0
    %258 = vmatmul.mubr.bf16.gmra.mxu0 %v223
    %v259 = vpop.f32.mrf.mxu0
    %v260 = vadd.f32 0.0, %v259
    %v261 = vpop.f32.mrf.mxu0
    %v262 = vpop.f32.mrf.mxu0
    %v263 = vadd.f32 0.0, %v262
    %v264 = vpop.f32.mrf.mxu0
    %265 = vdwg.mxu0
    %v266 = vadd.f32 %v186, %v260
    %v267 = vadd.f32 %v187, %v263
    %268 = vst.msk [vmem:[#allocation3] sm:$0xff] %vm123, %v266
    %269 = vst.msk [vmem:[#allocation3 + $0x8] sm:$0xff] %vm123, %v267
    // Predicated region
    $region34: #{tpu_custom_call.1} parent=1 // pred_check
      %p270 = pneg %p28
    $region35: #{tpu_custom_call.1} parent=1 // pred_check_branch
      %272 = sbr.rel (%p270) target = $region37
    $region36: #{tpu_custom_call.1} parent=1 // pred_region
      %v273 = vld [vmem:[#allocation3] sm:$0xff]
      %v274 = vld [vmem:[#allocation3 + $0x8] sm:$0xff]
      %v275 = vld [vmem:[%s6] sm:$0x1]
      %v277 = vlaneseq
      %v278 = vshrl.u32 %v277, 7
      %v279 = vsub.s32 0, %v278
      %v280 = vrot.slane %v275, %v279
      %v282 = vadd.f32 %v273, %v280
      %v283 = vadd.f32 %v274, %v280
      %v284 = vld [vmem:[%s0] sm:$0xff]
      %v285 = vld [vmem:[%s0 + $0x8] sm:$0xff]
      %v286 = vadd.f32 %v282, %v284
      %v287 = vadd.f32 %v283, %v285
      %288 = vst.msk [vmem:[#allocation4] sm:$0xff] %vm123, %v286
      %289 = vst.msk [vmem:[#allocation4 + $0x8] sm:$0xff] %vm123, %v287
    $region37: #{tpu_custom_call.1} parent=1 // pred_fallthru
      _
    // Predicated region
    $region38: #{tpu_custom_call.1} parent=1 // pred_check
      _
    $region39: #{tpu_custom_call.1} parent=1 // pred_check_branch
      %291 = sbr.rel (0) target = $region41
    $region40: #{tpu_custom_call.1} parent=1 // pred_region
      %s293 = ssub.s32 256, 256
      %294 = vsyncadd [#allocation5], %s293
      %s295 = sshll.u32 [#allocation4], 4
      %s296 = int_to_ptr.vmem [resolvable:$true] %s295
      %301 = dma.vmem_to_hbm [thread:$0]  %s296, 256, %s7, [#allocation5], 128, 128, 8
    $region41: #{tpu_custom_call.1} parent=1 // pred_fallthru
      _
    // Predicated region
    $region42: #{tpu_custom_call.1} parent=1 // pred_check
      _
    $region43: #{tpu_custom_call.1} parent=1 // pred_check_branch
      %303 = sbr.rel (0) target = $region45
    $region44: #{tpu_custom_call.1} parent=1 // pred_region
      %304 = dma.done [#allocation5], 256
    $region45: #{tpu_custom_call.1} parent=1 // pred_fallthru
      _
    %305 = vsyncpa [#allocation5], 1

</llo_original>
